<compile_context>
chip_gen: v7x
topology: tpu7x:2x2x1
jax: 0.10.0
libtpu: 0.0.40
codegen_flags: <defaults>
</compile_context>

<pallas_src>
import functools

import jax
import jax.numpy as jnp
from jax.experimental import pallas as pl
from jax.experimental.pallas import tpu as pltpu

LN_EPS = 1e-5  # torch.nn.LayerNorm default
LANE = 128
SUBLANE = 8


def _round_up(x, m):
    return ((x + m - 1) // m) * m


# ----------------------------- reference (pure JAX) -----------------------------

def _layernorm_ref(h, gamma, beta):
    mean = jnp.mean(h, axis=-1, keepdims=True)
    var = jnp.mean((h - mean) ** 2, axis=-1, keepdims=True)
    return (h - mean) * jax.lax.rsqrt(var + LN_EPS) * gamma + beta


def reference_forward(q, v, u, params):
    """Pure-JAX f32 reference of the same forward pass (for correctness check)."""
    w0, b0, g0, be0, w1, b1, g1, be1, wo, bo = params
    x = jnp.concatenate([q, v, u], axis=-1)
    h = jnp.tanh(_layernorm_ref(x @ w0 + b0, g0, be0))
    h = jnp.tanh(_layernorm_ref(h @ w1 + b1, g1, be1))
    out = h @ wo + bo
    return out[:, :, None]


# --------------------------------- Pallas kernel --------------------------------

def _layernorm_mxu(h, gamma, beta, ones_m, n_true):
    """LayerNorm with MXU-based moments.

    s = h @ ones, ss = (h*h) @ ones give the row-sums broadcast across every lane
    (no XLU cross-lane reduction, no keepdims broadcast). `h` may be zero-padded
    along the lane axis: zeros contribute nothing to the sums and the divisor uses
    the TRUE feature width, so this is exact. Moment math stays f32.
    """
    inv_n = 1.0 / float(n_true)
    s = jnp.dot(h, ones_m, preferred_element_type=jnp.float32)
    ss = jnp.dot(h * h, ones_m, preferred_element_type=jnp.float32)
    mean = s * inv_n
    var = jnp.maximum(ss * inv_n - mean * mean, 0.0)  # guard f32 cancellation
    return (h - mean) * jax.lax.rsqrt(var + LN_EPS) * gamma + beta


def lnmlp_kernel(x_ref, w0_ref, w1_ref, wo_ref, vec_ref, ones0_ref, ones1_ref,
                 o_ref, *, h0_true, h1_true):
    """One batch tile of the LNMLP: 2x (Linear -> LN -> tanh) + output Linear."""
    H0p = w0_ref.shape[1]
    H1p = w1_ref.shape[1]
    qdim = wo_ref.shape[1]

    # Packed (8, Wmax) parameter block: b0, g0, be0, b1, g1, be1, bo, 0.
    vec = vec_ref[...]
    b0, g0, be0 = vec[0:1, :H0p], vec[1:2, :H0p], vec[2:3, :H0p]
    b1, g1, be1 = vec[3:4, :H1p], vec[4:5, :H1p], vec[5:6, :H1p]
    bo = vec[6:7, :qdim]

    # Layer 0: single fused dot over the pre-concatenated input (bf16 operands,
    # f32 accumulation). Padded weight columns are zero -> padded lanes stay 0.
    xb = x_ref[...].astype(jnp.bfloat16)
    h = jnp.dot(xb, w0_ref[...], preferred_element_type=jnp.float32) + b0
    h = jnp.tanh(_layernorm_mxu(h, g0, be0, ones0_ref[...], h0_true))

    # Layer 1.
    h = jnp.dot(h.astype(jnp.bfloat16), w1_ref[...],
                preferred_element_type=jnp.float32) + b1
    h = jnp.tanh(_layernorm_mxu(h, g1, be1, ones1_ref[...], h1_true))

    # Output Linear at true qdim width (slim, masked store).
    out = jnp.dot(h.astype(jnp.bfloat16), wo_ref[...],
                  preferred_element_type=jnp.float32) + bo
    o_ref[...] = out.astype(o_ref.dtype)


# --------------------------------- host wrappers ---------------------------------

def init_params(key, qdim, udim, hidden_sizes):
    """Deterministic synthetic weights matching LNMLP(qdim*2+udim, hidden_sizes, qdim)."""
    assert len(hidden_sizes) == 2, "this script fixes the kernel to 2 hidden layers"
    d_in = 2 * qdim + udim
    h0, h1 = hidden_sizes
    ks = jax.random.split(key, 6)
    scale = 0.1
    params = (
        scale * jax.random.normal(ks[0], (d_in, h0), jnp.float32),   # w0
        scale * jax.random.normal(ks[1], (1, h0), jnp.float32),      # b0
        jnp.ones((1, h0), jnp.float32),                              # ln0 gamma
        jnp.zeros((1, h0), jnp.float32),                             # ln0 beta
        scale * jax.random.normal(ks[2], (h0, h1), jnp.float32),     # w1
        scale * jax.random.normal(ks[3], (1, h1), jnp.float32),      # b1
        jnp.ones((1, h1), jnp.float32),                              # ln1 gamma
        jnp.zeros((1, h1), jnp.float32),                             # ln1 beta
        scale * jax.random.normal(ks[4], (h1, qdim), jnp.float32),   # w_out
        scale * jax.random.normal(ks[5], (1, qdim), jnp.float32),    # b_out
    )
    return params


def prepare_params(params):
    """Pad hidden feature dims to 128 lanes (exact: zeros), cast MXU operands to bf16,
    pack the seven (1, H) vectors into one (8, Wmax) f32 block, and build the all-ones
    matrices used for MXU LayerNorm reductions."""
    w0, b0, g0, be0, w1, b1, g1, be1, wo, bo = params
    h0, h1 = w0.shape[1], w1.shape[1]
    qdim = wo.shape[1]
    H0, H1 = _round_up(h0, LANE), _round_up(h1, LANE)
    Wmax = max(H0, H1)

    def pad_cols(a, n):
        return jnp.pad(a, ((0, 0), (0, n - a.shape[1])))

    def pad_rows(a, n):
        return jnp.pad(a, ((0, n - a.shape[0]), (0, 0)))

    # Matmul operands in bf16; f32 accumulation happens in-kernel.
    w0p = pad_cols(w0, H0).astype(jnp.bfloat16)                  # (d_in, H0)
    w1p = pad_cols(pad_rows(w1, H0), H1).astype(jnp.bfloat16)    # (H0, H1)
    wop = pad_rows(wo, H1).astype(jnp.bfloat16)                  # (H1, qdim) -- slim output

    # Pack b0,g0,be0,b1,g1,be1,bo (+zero row) into one (8, Wmax) f32 array: one DMA/vreg.
    rows = [pad_cols(a.astype(jnp.float32), Wmax)
            for a in (b0, g0, be0, b1, g1, be1, bo)]
    rows.append(jnp.zeros((1, Wmax), jnp.float32))
    vec = jnp.concatenate(rows, axis=0)                          # (8, Wmax)

    ones0 = jnp.ones((H0, H0), jnp.float32)
    ones1 = jnp.ones((H1, H1), jnp.float32)

    padded = (w0p, w1p, wop, vec, ones0, ones1)
    return padded, (h0, h1), qdim


def _choose_tile(B, batch_tile):
    """Pick (tile, steps) minimising batch padding, with an even step count (>=2 when
    B > 8) so v7x megacore shards the batch axis across both TensorCores."""
    steps = max(pl.cdiv(B, batch_tile), 1)
    if steps == 1 and B > SUBLANE:
        steps = 2
    elif steps > 1 and steps % 2 == 1:
        steps += 1
    tile = _round_up(pl.cdiv(B, steps), SUBLANE)
    return tile, steps


def generalized_force_net(q, v, u, padded_params, true_widths, qdim, *, batch_tile=2048):
    """Forward pass: returns F of shape (B, qdim, 1)."""
    B = q.shape[0]
    h0, h1 = true_widths
    w0p = padded_params[0]
    d_in = w0p.shape[0]

    # Tiny concat (2*qdim+udim floats/row) done by XLA in the wrapper; the kernel
    # then needs a single fused layer-0 dot.
    x = jnp.concatenate([q, v, u], axis=-1).astype(jnp.float32)
    assert x.shape == (B, d_in)

    tile, steps = _choose_tile(B, batch_tile)
    B_pad = tile * steps
    if B_pad != B:
        x = jnp.pad(x, ((0, B_pad - B), (0, 0)))

    kernel = functools.partial(lnmlp_kernel, h0_true=h0, h1_true=h1)

    in_specs = [pl.BlockSpec((tile, d_in), lambda i: (i, 0))]
    # Grid-invariant parameter blocks -> fetched once, not per step.
    in_specs += [pl.BlockSpec(p.shape, lambda i: (0, 0)) for p in padded_params]

    out = pl.pallas_call(
        kernel,
        out_shape=jax.ShapeDtypeStruct((B_pad, qdim), jnp.float32),
        grid=(steps,),
        in_specs=in_specs,
        out_specs=pl.BlockSpec((tile, qdim), lambda i: (i, 0)),
        compiler_params=pltpu.CompilerParams(
            dimension_semantics=("parallel",)),
    )(x, *padded_params)

    F = out[:B][:, :, None]  # drop batch padding only (output is already slim); unsqueeze(2)
    assert F.shape == (B, qdim, 1)
    return F


if __name__ == "__main__":
    qdim, udim = 4, 2
    hidden_sizes = [32, 32]
    B = 16

    key = jax.random.PRNGKey(0)
    k_params, k_q, k_v, k_u = jax.random.split(key, 4)
    params = init_params(k_params, qdim, udim, hidden_sizes)
    padded_params, true_widths, qdim_out = prepare_params(params)

    q = jax.random.normal(k_q, (B, qdim), jnp.float32)
    v = jax.random.normal(k_v, (B, qdim), jnp.float32)
    u = jax.random.normal(k_u, (B, udim), jnp.float32)

    F = generalized_force_net(q, v, u, padded_params, true_widths, qdim_out)
    F = jax.block_until_ready(F)

    F_ref = reference_forward(q, v, u, params)
    assert F.shape == (B, qdim, 1)
    # Tolerance relaxed vs. pure-f32 because matmul operands are bf16 (f32 accumulate).
    assert jnp.allclose(F, F_ref, atol=3e-2, rtol=3e-2), (
        float(jnp.max(jnp.abs(F - F_ref))))

    print("KERNEL_OK")
</pallas_src>

<mosaic_0001>
module attributes {stable_mosaic.version = 11 : i64} {
  func.func @lnmlp_kernel(%arg0: i32, %arg1: memref<8x10xf32, #tpu.memory_space<vmem>>, %arg2: memref<10x128xbf16, #tpu.memory_space<vmem>>, %arg3: memref<128x128xbf16, #tpu.memory_space<vmem>>, %arg4: memref<128x4xbf16, #tpu.memory_space<vmem>>, %arg5: memref<8x128xf32, #tpu.memory_space<vmem>>, %arg6: memref<128x128xf32, #tpu.memory_space<vmem>>, %arg7: memref<128x128xf32, #tpu.memory_space<vmem>>, %arg8: memref<8x4xf32, #tpu.memory_space<vmem>>) attributes {dimension_semantics = [#tpu.dimension_semantics<parallel>], iteration_bounds = array<i64: 2>, scalar_prefetch = 0 : i64, scratch_operands = 0 : i64, tpu.core_type = #tpu.core_type<tc>, window_params = [{transform_indices = @transform_0, window_bounds = array<i64: 8, 10>}, {pipeline_mode = #tpu.pipeline_mode<synchronous>, transform_indices = @transform_1, window_bounds = array<i64: 10, 128>}, {pipeline_mode = #tpu.pipeline_mode<synchronous>, transform_indices = @transform_2, window_bounds = array<i64: 128, 128>}, {pipeline_mode = #tpu.pipeline_mode<synchronous>, transform_indices = @transform_3, window_bounds = array<i64: 128, 4>}, {pipeline_mode = #tpu.pipeline_mode<synchronous>, transform_indices = @transform_4, window_bounds = array<i64: 8, 128>}, {pipeline_mode = #tpu.pipeline_mode<synchronous>, transform_indices = @transform_5, window_bounds = array<i64: 128, 128>}, {pipeline_mode = #tpu.pipeline_mode<synchronous>, transform_indices = @transform_6, window_bounds = array<i64: 128, 128>}, {transform_indices = @transform_7, window_bounds = array<i64: 8, 4>}]} {
    %c0 = arith.constant 0 : index
    %c0_0 = arith.constant 0 : index
    %0 = vector.load %arg5[%c0, %c0_0] : memref<8x128xf32, #tpu.memory_space<vmem>>, vector<8x128xf32>
    %1 = vector.extract_strided_slice %0 {offsets = [0, 0], sizes = [1, 128], strides = [1, 1]} : vector<8x128xf32> to vector<1x128xf32>
    %2 = vector.extract_strided_slice %0 {offsets = [1, 0], sizes = [1, 128], strides = [1, 1]} : vector<8x128xf32> to vector<1x128xf32>
    %3 = vector.extract_strided_slice %0 {offsets = [2, 0], sizes = [1, 128], strides = [1, 1]} : vector<8x128xf32> to vector<1x128xf32>
    %4 = vector.extract_strided_slice %0 {offsets = [3, 0], sizes = [1, 128], strides = [1, 1]} : vector<8x128xf32> to vector<1x128xf32>
    %5 = vector.extract_strided_slice %0 {offsets = [4, 0], sizes = [1, 128], strides = [1, 1]} : vector<8x128xf32> to vector<1x128xf32>
    %6 = vector.extract_strided_slice %0 {offsets = [5, 0], sizes = [1, 128], strides = [1, 1]} : vector<8x128xf32> to vector<1x128xf32>
    %7 = vector.extract_strided_slice %0 {offsets = [6, 0], sizes = [1, 4], strides = [1, 1]} : vector<8x128xf32> to vector<1x4xf32>
    %c0_1 = arith.constant 0 : index
    %c0_2 = arith.constant 0 : index
    %8 = vector.load %arg1[%c0_1, %c0_2] : memref<8x10xf32, #tpu.memory_space<vmem>>, vector<8x10xf32>
    %9 = arith.truncf %8 : vector<8x10xf32> to vector<8x10xbf16>
    %c0_3 = arith.constant 0 : index
    %c0_4 = arith.constant 0 : index
    %10 = vector.load %arg2[%c0_3, %c0_4] : memref<10x128xbf16, #tpu.memory_space<vmem>>, vector<10x128xbf16>
    %cst = arith.constant dense<0.000000e+00> : vector<8x128xf32>
    %11 = tpu.matmul %9, %10, %cst {dimension_numbers = #tpu.dot_dimension_numbers<[1], [0], [0], [1], [0, 0, 1, 1], [], []>} : vector<8x10xbf16>, vector<10x128xbf16>, vector<8x128xf32> -> vector<8x128xf32>
    %12 = vector.broadcast %1 : vector<1x128xf32> to vector<8x128xf32>
    %13 = arith.addf %11, %12 : vector<8x128xf32>
    %c0_5 = arith.constant 0 : index
    %c0_6 = arith.constant 0 : index
    %14 = vector.load %arg6[%c0_5, %c0_6] : memref<128x128xf32, #tpu.memory_space<vmem>>, vector<128x128xf32>
    %cst_7 = arith.constant dense<0.000000e+00> : vector<8x128xf32>
    %15 = tpu.matmul %13, %14, %cst_7 {dimension_numbers = #tpu.dot_dimension_numbers<[1], [0], [0], [1], [0, 0, 1, 1], [], []>} : vector<8x128xf32>, vector<128x128xf32>, vector<8x128xf32> -> vector<8x128xf32>
    %16 = arith.mulf %13, %13 : vector<8x128xf32>
    %cst_8 = arith.constant dense<0.000000e+00> : vector<8x128xf32>
    %17 = tpu.matmul %16, %14, %cst_8 {dimension_numbers = #tpu.dot_dimension_numbers<[1], [0], [0], [1], [0, 0, 1, 1], [], []>} : vector<8x128xf32>, vector<128x128xf32>, vector<8x128xf32> -> vector<8x128xf32>
    %cst_9 = arith.constant 3.125000e-02 : f32
    %18 = vector.broadcast %cst_9 : f32 to vector<8x128xf32>
    %19 = arith.mulf %15, %18 : vector<8x128xf32>
    %cst_10 = arith.constant 3.125000e-02 : f32
    %20 = vector.broadcast %cst_10 : f32 to vector<8x128xf32>
    %21 = arith.mulf %17, %20 : vector<8x128xf32>
    %22 = arith.mulf %19, %19 : vector<8x128xf32>
    %23 = arith.subf %21, %22 : vector<8x128xf32>
    %cst_11 = arith.constant 0.000000e+00 : f32
    %24 = vector.broadcast %cst_11 : f32 to vector<8x128xf32>
    %25 = arith.maximumf %23, %24 : vector<8x128xf32>
    %26 = arith.subf %13, %19 : vector<8x128xf32>
    %cst_12 = arith.constant 9.99999974E-6 : f32
    %27 = vector.broadcast %cst_12 : f32 to vector<8x128xf32>
    %28 = arith.addf %25, %27 : vector<8x128xf32>
    %29 = math.rsqrt %28 : vector<8x128xf32>
    %30 = arith.mulf %26, %29 : vector<8x128xf32>
    %31 = vector.broadcast %2 : vector<1x128xf32> to vector<8x128xf32>
    %32 = arith.mulf %30, %31 : vector<8x128xf32>
    %33 = vector.broadcast %3 : vector<1x128xf32> to vector<8x128xf32>
    %34 = arith.addf %32, %33 : vector<8x128xf32>
    %35 = math.tanh %34 : vector<8x128xf32>
    %36 = arith.truncf %35 : vector<8x128xf32> to vector<8x128xbf16>
    %c0_13 = arith.constant 0 : index
    %c0_14 = arith.constant 0 : index
    %37 = vector.load %arg3[%c0_13, %c0_14] : memref<128x128xbf16, #tpu.memory_space<vmem>>, vector<128x128xbf16>
    %cst_15 = arith.constant dense<0.000000e+00> : vector<8x128xf32>
    %38 = tpu.matmul %36, %37, %cst_15 {dimension_numbers = #tpu.dot_dimension_numbers<[1], [0], [0], [1], [0, 0, 1, 1], [], []>} : vector<8x128xbf16>, vector<128x128xbf16>, vector<8x128xf32> -> vector<8x128xf32>
    %39 = vector.broadcast %4 : vector<1x128xf32> to vector<8x128xf32>
    %40 = arith.addf %38, %39 : vector<8x128xf32>
    %c0_16 = arith.constant 0 : index
    %c0_17 = arith.constant 0 : index
    %41 = vector.load %arg7[%c0_16, %c0_17] : memref<128x128xf32, #tpu.memory_space<vmem>>, vector<128x128xf32>
    %cst_18 = arith.constant dense<0.000000e+00> : vector<8x128xf32>
    %42 = tpu.matmul %40, %41, %cst_18 {dimension_numbers = #tpu.dot_dimension_numbers<[1], [0], [0], [1], [0, 0, 1, 1], [], []>} : vector<8x128xf32>, vector<128x128xf32>, vector<8x128xf32> -> vector<8x128xf32>
    %43 = arith.mulf %40, %40 : vector<8x128xf32>
    %cst_19 = arith.constant dense<0.000000e+00> : vector<8x128xf32>
    %44 = tpu.matmul %43, %41, %cst_19 {dimension_numbers = #tpu.dot_dimension_numbers<[1], [0], [0], [1], [0, 0, 1, 1], [], []>} : vector<8x128xf32>, vector<128x128xf32>, vector<8x128xf32> -> vector<8x128xf32>
    %cst_20 = arith.constant 3.125000e-02 : f32
    %45 = vector.broadcast %cst_20 : f32 to vector<8x128xf32>
    %46 = arith.mulf %42, %45 : vector<8x128xf32>
    %cst_21 = arith.constant 3.125000e-02 : f32
    %47 = vector.broadcast %cst_21 : f32 to vector<8x128xf32>
    %48 = arith.mulf %44, %47 : vector<8x128xf32>
    %49 = arith.mulf %46, %46 : vector<8x128xf32>
    %50 = arith.subf %48, %49 : vector<8x128xf32>
    %cst_22 = arith.constant 0.000000e+00 : f32
    %51 = vector.broadcast %cst_22 : f32 to vector<8x128xf32>
    %52 = arith.maximumf %50, %51 : vector<8x128xf32>
    %53 = arith.subf %40, %46 : vector<8x128xf32>
    %cst_23 = arith.constant 9.99999974E-6 : f32
    %54 = vector.broadcast %cst_23 : f32 to vector<8x128xf32>
    %55 = arith.addf %52, %54 : vector<8x128xf32>
    %56 = math.rsqrt %55 : vector<8x128xf32>
    %57 = arith.mulf %53, %56 : vector<8x128xf32>
    %58 = vector.broadcast %5 : vector<1x128xf32> to vector<8x128xf32>
    %59 = arith.mulf %57, %58 : vector<8x128xf32>
    %60 = vector.broadcast %6 : vector<1x128xf32> to vector<8x128xf32>
    %61 = arith.addf %59, %60 : vector<8x128xf32>
    %62 = math.tanh %61 : vector<8x128xf32>
    %63 = arith.truncf %62 : vector<8x128xf32> to vector<8x128xbf16>
    %c0_24 = arith.constant 0 : index
    %c0_25 = arith.constant 0 : index
    %64 = vector.load %arg4[%c0_24, %c0_25] : memref<128x4xbf16, #tpu.memory_space<vmem>>, vector<128x4xbf16>
    %cst_26 = arith.constant dense<0.000000e+00> : vector<8x4xf32>
    %65 = tpu.matmul %63, %64, %cst_26 {dimension_numbers = #tpu.dot_dimension_numbers<[1], [0], [0], [1], [0, 0, 1, 1], [], []>} : vector<8x128xbf16>, vector<128x4xbf16>, vector<8x4xf32> -> vector<8x4xf32>
    %66 = vector.broadcast %7 : vector<1x4xf32> to vector<8x4xf32>
    %67 = arith.addf %65, %66 : vector<8x4xf32>
    %c0_27 = arith.constant 0 : index
    %c0_28 = arith.constant 0 : index
    %68 = vector.load %arg8[%c0_27, %c0_28] : memref<8x4xf32, #tpu.memory_space<vmem>>, vector<8x4xf32>
    tpu.vector_store %arg8[%c0_27, %c0_28], %67 {strides = array<i32>} : memref<8x4xf32, #tpu.memory_space<vmem>>, vector<8x4xf32>,
    return
  }
  func.func @transform_0(%arg0: i32) -> (i32, i32) {
    %c0_i32 = arith.constant 0 : i32
    %c0_i32_0 = arith.constant 0 : i32
    return %arg0, %c0_i32 : i32, i32
  }
  func.func @transform_1(%arg0: i32) -> (i32, i32) {
    %c0_i32 = arith.constant 0 : i32
    %c0_i32_0 = arith.constant 0 : i32
    %c0_i32_1 = arith.constant 0 : i32
    return %c0_i32, %c0_i32_0 : i32, i32
  }
  func.func @transform_2(%arg0: i32) -> (i32, i32) {
    %c0_i32 = arith.constant 0 : i32
    %c0_i32_0 = arith.constant 0 : i32
    %c0_i32_1 = arith.constant 0 : i32
    return %c0_i32, %c0_i32_0 : i32, i32
  }
  func.func @transform_3(%arg0: i32) -> (i32, i32) {
    %c0_i32 = arith.constant 0 : i32
    %c0_i32_0 = arith.constant 0 : i32
    %c0_i32_1 = arith.constant 0 : i32
    return %c0_i32, %c0_i32_0 : i32, i32
  }
  func.func @transform_4(%arg0: i32) -> (i32, i32) {
    %c0_i32 = arith.constant 0 : i32
    %c0_i32_0 = arith.constant 0 : i32
    %c0_i32_1 = arith.constant 0 : i32
    return %c0_i32, %c0_i32_0 : i32, i32
  }
  func.func @transform_5(%arg0: i32) -> (i32, i32) {
    %c0_i32 = arith.constant 0 : i32
    %c0_i32_0 = arith.constant 0 : i32
    %c0_i32_1 = arith.constant 0 : i32
    return %c0_i32, %c0_i32_0 : i32, i32
  }
  func.func @transform_6(%arg0: i32) -> (i32, i32) {
    %c0_i32 = arith.constant 0 : i32
    %c0_i32_0 = arith.constant 0 : i32
    %c0_i32_1 = arith.constant 0 : i32
    return %c0_i32, %c0_i32_0 : i32, i32
  }
  func.func @transform_7(%arg0: i32) -> (i32, i32) {
    %c0_i32 = arith.constant 0 : i32
    %c0_i32_0 = arith.constant 0 : i32
    return %arg0, %c0_i32 : i32, i32
  }
}

</mosaic_0001>

<llo_original>
// kernel: tpu_custom_call.1
$region0: #{tpu_custom_call.1}
  #allocation0 [shape = 'u32[]', space=smem, size = 0x4, offset = 0x4, fixed_abs, tag = 'smem constant byte address 0x4 - core index']
  #allocation1 [shape = 'u32[144,128]{1,0:T(1,128)}', space=vmem, size = 0x12000, scoped, tag = 'internal scratch']
  %s0 = inlined_call_operand.hbm [shape: f32[16,10], index: 0, kind: input, shape index: {}]
  %s1 = inlined_call_operand.vmem [shape: bf16[10,128], index: 1, kind: input, shape index: {}]
  %s2 = inlined_call_operand.vmem [shape: bf16[128,128], index: 2, kind: input, shape index: {}]
  %s3 = inlined_call_operand.vmem [shape: bf16[128,4], index: 3, kind: input, shape index: {}]
  %s4 = inlined_call_operand.vmem [shape: f32[8,128], index: 4, kind: input, shape index: {}]
  %s5 = inlined_call_operand.hbm [shape: f32[128,128], index: 5, kind: input, shape index: {}]
  %s6 = inlined_call_operand.hbm [shape: f32[128,128], index: 6, kind: input, shape index: {}]
  %s7 = inlined_call_operand.vmem [shape: f32[16,4], index: 7, kind: output, shape index: {}]
  %s8 = sld [smem:[#allocation0]]
  $region73: #{tpu_custom_call.1} parent=0
    _
  %s10 = ssub.s32 1, %s8
  %s11 = scalar_select 0, %s10, %s8
  $region1: #{tpu_custom_call.1} parent=0
    #allocation2 [shape = 'u8[8192]{0}', space=vmem, size = 0x2000, scoped, tag = 'input window, operand 0']
    #allocation3 [shape = 's32[2]{0}', space=sflag, size = 0x8, scoped, tag = 'scoped memory for tpu_custom_call.1']
    #allocation4 [shape = 'u8[65536]{0}', space=vmem, size = 0x10000, scoped, tag = 'input window, operand 5, single buffered']
    #allocation5 [shape = 's32[1]{0}', space=sflag, size = 0x4, scoped, tag = 'scoped memory for tpu_custom_call.1']
    #allocation6 [shape = 'u8[65536]{0}', space=vmem, size = 0x10000, scoped, tag = 'input window, operand 6, single buffered']
    %12 = vsyncpa [#allocation3], 0
    %s13 = scalar_lea.sflag [#allocation3], 1
    %14 = vsyncpa %s13, 0
    %15 = vsyncpa [#allocation5], 0
    loop: start=0, step=1, limit=4
    $region2: #{tpu_custom_call.1} parent=1 // loop_pre_header
      _
    $region3: #{tpu_custom_call.1} parent=1 // loop_header
      %s17 = sphi 0, %s21
      %p18 = scmp.ge.s32.totalorder %s17, 4
      %s27 = sphi 0, %s29
      %s30 = sphi 0, %s27
      %s31 = sphi 0, %s30
      %s47 = sphi 0, %s31
      %s51 = sphi 0, %s51
      %s53 = sphi 0, %s51
      %s54 = sphi 0, %s53
      %s68 = sphi 0, %s54
      %s72 = sphi 0, %s72
      %s74 = sphi 0, %s72
      %s75 = sphi 0, %s74
      %s89 = sphi 0, %s75
      %s93 = sphi 0, %s93
      %s95 = sphi 0, %s93
      %s96 = sphi 0, %s95
      %s110 = sphi 0, %s96
      %s114 = sphi 0, %s114
      %s116 = sphi 0, %s114
      %s117 = sphi 0, %s116
      %s131 = sphi 0, %s117
      %s135 = sphi 0, %s135
      %s137 = sphi 0, %s135
      %s138 = sphi 0, %s137
      %s152 = sphi 0, %s138
      %s156 = sphi 0, %s156
      %s158 = sphi 0, %s156
      %s159 = sphi 0, %s158
      %s173 = sphi 0, %s159
      %s179 = sphi 0, %s181
      %s182 = sphi 0, %s179
      %s183 = sphi 0, %s182
      %s199 = sphi 0, %s183
    $region4: #{tpu_custom_call.1} parent=1 // loop_header_branch
      %20 = sbr.rel (%p18) target = $region8
    $region5: #{tpu_custom_call.1} parent=1 // loop_body
      %s22 = ssub.s32 %s17, 1
      %s23 = ssub.s32 %s17, 2
      %s24 = sadd.s32 %s17, 1
      %s25 = ssub.s32 %s17, %s24
      %p26 = scmp.eq.s32.totalorder %s25, 0
      %s28 = sadd.s32 %s27, 1
      %s29 = scalar_select %p26, %s27, %s28
      %p32 = pneg %p26
      %p33 = scmp.eq.s32.totalorder %s17, 1
      %p34 = por %p32, %p33
      %p35 = scmp.ne.s32.totalorder %s27, %s30
      %p36 = scmp.eq.s32.totalorder %s17, 0
      %p37 = por %p35, %p36
      %p38 = scmp.ne.s32.totalorder %s27, %s30
      %p39 = scmp.eq.s32.totalorder %s22, 1
      %p40 = por %p38, %p39
      %p41 = scmp.ne.s32.totalorder %s30, %s31
      %p42 = scmp.eq.s32.totalorder %s22, 0
      %p43 = por %p41, %p42
      %p44 = scmp.ne.s32.totalorder %s30, %s31
      %p45 = scmp.eq.s32.totalorder %s23, 1
      %p46 = por %p44, %p45
      %p48 = scmp.ne.s32.totalorder %s31, %s47
      %p49 = scmp.eq.s32.totalorder %s23, 0
      %p50 = por %p48, %p49
      %s52 = sadd.s32 %s51, 1
      %p55 = scmp.eq.s32.totalorder %s17, 1
      %p56 = scmp.ne.s32.totalorder %s51, %s53
      %p57 = scmp.eq.s32.totalorder %s17, 0
      %p58 = por %p56, %p57
      %p59 = scmp.ne.s32.totalorder %s51, %s53
      %p60 = scmp.eq.s32.totalorder %s22, 1
      %p61 = por %p59, %p60
      %p62 = scmp.ne.s32.totalorder %s53, %s54
      %p63 = scmp.eq.s32.totalorder %s22, 0
      %p64 = por %p62, %p63
      %p65 = scmp.ne.s32.totalorder %s53, %s54
      %p66 = scmp.eq.s32.totalorder %s23, 1
      %p67 = por %p65, %p66
      %p69 = scmp.ne.s32.totalorder %s54, %s68
      %p70 = scmp.eq.s32.totalorder %s23, 0
      %p71 = por %p69, %p70
      %s73 = sadd.s32 %s72, 1
      %p76 = scmp.eq.s32.totalorder %s17, 1
      %p77 = scmp.ne.s32.totalorder %s72, %s74
      %p78 = scmp.eq.s32.totalorder %s17, 0
      %p79 = por %p77, %p78
      %p80 = scmp.ne.s32.totalorder %s72, %s74
      %p81 = scmp.eq.s32.totalorder %s22, 1
      %p82 = por %p80, %p81
      %p83 = scmp.ne.s32.totalorder %s74, %s75
      %p84 = scmp.eq.s32.totalorder %s22, 0
      %p85 = por %p83, %p84
      %p86 = scmp.ne.s32.totalorder %s74, %s75
      %p87 = scmp.eq.s32.totalorder %s23, 1
      %p88 = por %p86, %p87
      %p90 = scmp.ne.s32.totalorder %s75, %s89
      %p91 = scmp.eq.s32.totalorder %s23, 0
      %p92 = por %p90, %p91
      %s94 = sadd.s32 %s93, 1
      %p97 = scmp.eq.s32.totalorder %s17, 1
      %p98 = scmp.ne.s32.totalorder %s93, %s95
      %p99 = scmp.eq.s32.totalorder %s17, 0
      %p100 = por %p98, %p99
      %p101 = scmp.ne.s32.totalorder %s93, %s95
      %p102 = scmp.eq.s32.totalorder %s22, 1
      %p103 = por %p101, %p102
      %p104 = scmp.ne.s32.totalorder %s95, %s96
      %p105 = scmp.eq.s32.totalorder %s22, 0
      %p106 = por %p104, %p105
      %p107 = scmp.ne.s32.totalorder %s95, %s96
      %p108 = scmp.eq.s32.totalorder %s23, 1
      %p109 = por %p107, %p108
      %p111 = scmp.ne.s32.totalorder %s96, %s110
      %p112 = scmp.eq.s32.totalorder %s23, 0
      %p113 = por %p111, %p112
      %s115 = sadd.s32 %s114, 1
      %p118 = scmp.eq.s32.totalorder %s17, 1
      %p119 = scmp.ne.s32.totalorder %s114, %s116
      %p120 = scmp.eq.s32.totalorder %s17, 0
      %p121 = por %p119, %p120
      %p122 = scmp.ne.s32.totalorder %s114, %s116
      %p123 = scmp.eq.s32.totalorder %s22, 1
      %p124 = por %p122, %p123
      %p125 = scmp.ne.s32.totalorder %s116, %s117
      %p126 = scmp.eq.s32.totalorder %s22, 0
      %p127 = por %p125, %p126
      %p128 = scmp.ne.s32.totalorder %s116, %s117
      %p129 = scmp.eq.s32.totalorder %s23, 1
      %p130 = por %p128, %p129
      %p132 = scmp.ne.s32.totalorder %s117, %s131
      %p133 = scmp.eq.s32.totalorder %s23, 0
      %p134 = por %p132, %p133
      %s136 = sadd.s32 %s135, 1
      %p139 = scmp.eq.s32.totalorder %s17, 1
      %p140 = scmp.ne.s32.totalorder %s135, %s137
      %p141 = scmp.eq.s32.totalorder %s17, 0
      %p142 = por %p140, %p141
      %p143 = scmp.ne.s32.totalorder %s135, %s137
      %p144 = scmp.eq.s32.totalorder %s22, 1
      %p145 = por %p143, %p144
      %p146 = scmp.ne.s32.totalorder %s137, %s138
      %p147 = scmp.eq.s32.totalorder %s22, 0
      %p148 = por %p146, %p147
      %p149 = scmp.ne.s32.totalorder %s137, %s138
      %p150 = scmp.eq.s32.totalorder %s23, 1
      %p151 = por %p149, %p150
      %p153 = scmp.ne.s32.totalorder %s138, %s152
      %p154 = scmp.eq.s32.totalorder %s23, 0
      %p155 = por %p153, %p154
      %s157 = sadd.s32 %s156, 1
      %p160 = scmp.eq.s32.totalorder %s17, 1
      %p161 = scmp.ne.s32.totalorder %s156, %s158
      %p162 = scmp.eq.s32.totalorder %s17, 0
      %p163 = por %p161, %p162
      %p164 = scmp.ne.s32.totalorder %s156, %s158
      %p165 = scmp.eq.s32.totalorder %s22, 1
      %p166 = por %p164, %p165
      %p167 = scmp.ne.s32.totalorder %s158, %s159
      %p168 = scmp.eq.s32.totalorder %s22, 0
      %p169 = por %p167, %p168
      %p170 = scmp.ne.s32.totalorder %s158, %s159
      %p171 = scmp.eq.s32.totalorder %s23, 1
      %p172 = por %p170, %p171
      %p174 = scmp.ne.s32.totalorder %s159, %s173
      %p175 = scmp.eq.s32.totalorder %s23, 0
      %p176 = por %p174, %p175
      %s177 = ssub.s32 %s17, %s24
      %p178 = scmp.eq.s32.totalorder %s177, 0
      %s180 = sadd.s32 %s179, 1
      %s181 = scalar_select %p178, %s179, %s180
      %p184 = pneg %p178
      %p185 = scmp.eq.s32.totalorder %s17, 1
      %p186 = por %p184, %p185
      %p187 = scmp.ne.s32.totalorder %s179, %s182
      %p188 = scmp.eq.s32.totalorder %s17, 0
      %p189 = por %p187, %p188
      %p190 = scmp.ne.s32.totalorder %s179, %s182
      %p191 = scmp.eq.s32.totalorder %s22, 1
      %p192 = por %p190, %p191
      %p193 = scmp.ne.s32.totalorder %s182, %s183
      %p194 = scmp.eq.s32.totalorder %s22, 0
      %p195 = por %p193, %p194
      %p196 = scmp.ne.s32.totalorder %s182, %s183
      %p197 = scmp.eq.s32.totalorder %s23, 1
      %p198 = por %p196, %p197
      %p200 = scmp.ne.s32.totalorder %s183, %s199
      %p201 = scmp.eq.s32.totalorder %s23, 0
      %p202 = por %p200, %p201
      %p203 = scmp.le.s32.totalorder 1, %s17
      %p204 = scmp.lt.s32.totalorder %s17, 3
      %p205 = pnand %p203, %p204
      %p206 = pneg %p205
      // Predicated region
      $region9: #{tpu_custom_call.1} parent=5 // pred_check
        _
      $region10: #{tpu_custom_call.1} parent=5 // pred_check_branch
        %208 = sbr.rel (%p205) target = $region12
      $region11: #{tpu_custom_call.1} parent=5 // pred_region
        %s209 = ssub.s32 %s17, 1
        // Predicated region
        $region13: #{tpu_custom_call.1} parent=11 // pred_check
          %p210 = pneg %p64
        $region14: #{tpu_custom_call.1} parent=11 // pred_check_branch
          %212 = sbr.rel (%p210) target = $region16
        $region15: #{tpu_custom_call.1} parent=11 // pred_region
          _
        $region16: #{tpu_custom_call.1} parent=11 // pred_fallthru
          _
        // Predicated region
        $region17: #{tpu_custom_call.1} parent=11 // pred_check
          %p213 = pneg %p85
        $region18: #{tpu_custom_call.1} parent=11 // pred_check_branch
          %215 = sbr.rel (%p213) target = $region20
        $region19: #{tpu_custom_call.1} parent=11 // pred_region
          _
        $region20: #{tpu_custom_call.1} parent=11 // pred_fallthru
          _
        // Predicated region
        $region21: #{tpu_custom_call.1} parent=11 // pred_check
          %p216 = pneg %p106
        $region22: #{tpu_custom_call.1} parent=11 // pred_check_branch
          %218 = sbr.rel (%p216) target = $region24
        $region23: #{tpu_custom_call.1} parent=11 // pred_region
          _
        $region24: #{tpu_custom_call.1} parent=11 // pred_fallthru
          _
        // Predicated region
        $region25: #{tpu_custom_call.1} parent=11 // pred_check
          %p219 = pneg %p127
        $region26: #{tpu_custom_call.1} parent=11 // pred_check_branch
          %221 = sbr.rel (%p219) target = $region28
        $region27: #{tpu_custom_call.1} parent=11 // pred_region
          _
        $region28: #{tpu_custom_call.1} parent=11 // pred_fallthru
          _
        // Predicated region
        $region29: #{tpu_custom_call.1} parent=11 // pred_check
          %p222 = pneg %p148
        $region30: #{tpu_custom_call.1} parent=11 // pred_check_branch
          %224 = sbr.rel (%p222) target = $region32
        $region31: #{tpu_custom_call.1} parent=11 // pred_region
          %s226 = ssub.s32 2048, 2048
          %227 = vsyncadd [#allocation5], %s226
          %s228 = sshll.u32 [#allocation4], 4
          %s229 = int_to_ptr.vmem [resolvable:$true] %s228
          %234 = dma.hbm_to_vmem [thread:$0]  %s5, 2048, %s229, [#allocation5], 128, 128, 8
        $region32: #{tpu_custom_call.1} parent=11 // pred_fallthru
          _
        // Predicated region
        $region33: #{tpu_custom_call.1} parent=11 // pred_check
          %p235 = pneg %p169
        $region34: #{tpu_custom_call.1} parent=11 // pred_check_branch
          %237 = sbr.rel (%p235) target = $region36
        $region35: #{tpu_custom_call.1} parent=11 // pred_region
          %s239 = ssub.s32 2048, 2048
          %240 = vsyncadd [#allocation5], %s239
          %s241 = sshll.u32 [#allocation6], 4
          %s242 = int_to_ptr.vmem [resolvable:$true] %s241
          %247 = dma.hbm_to_vmem [thread:$0]  %s6, 2048, %s242, [#allocation5], 128, 128, 8
        $region36: #{tpu_custom_call.1} parent=11 // pred_fallthru
          _
      $region12: #{tpu_custom_call.1} parent=5 // pred_fallthru
        _
      %p248 = scmp.lt.s32.totalorder %s17, 2
      // Predicated region
      $region37: #{tpu_custom_call.1} parent=5 // pred_check
        %p249 = pneg %p248
      $region38: #{tpu_custom_call.1} parent=5 // pred_check_branch
        %251 = sbr.rel (%p249) target = $region40
      $region39: #{tpu_custom_call.1} parent=5 // pred_region
        // Predicated region
        $region41: #{tpu_custom_call.1} parent=39 // pred_check
          %p252 = pneg %p37
        $region42: #{tpu_custom_call.1} parent=39 // pred_check_branch
          %254 = sbr.rel (%p252) target = $region44
        $region43: #{tpu_custom_call.1} parent=39 // pred_region
          %s255 = sand.u32 %s27, 1
          %s256 = scalar_lea.sflag [#allocation3], %s255
          %s257 = sand.u32 %s27, 1
          %s258 = smul.addr %s257, 8
          %s259 = scalar_lea.vmem [#allocation2], %s258
          %s261 = ssub.s32 128, 128
          %262 = vsyncadd %s256, %s261
          %s263 = smul.addr %s17, 128
          %s264 = scalar_lea.hbm %s0, %s263
          %s266 = sshll.u32 %s259, 4
          %s267 = int_to_ptr.vmem [resolvable:$true] %s266
          %269 = dma.hbm_to_vmem [thread:$0]  %s264, 128, %s267, %s256
        $region44: #{tpu_custom_call.1} parent=39 // pred_fallthru
          _
      $region40: #{tpu_custom_call.1} parent=5 // pred_fallthru
        _
      %p270 = scmp.le.s32.totalorder 1, %s17
      %p271 = scmp.lt.s32.totalorder %s17, 3
      %p272 = pnand %p270, %p271
      %p273 = pneg %p272
      // Predicated region
      $region45: #{tpu_custom_call.1} parent=5 // pred_check
        _
      $region46: #{tpu_custom_call.1} parent=5 // pred_check_branch
        %275 = sbr.rel (%p272) target = $region48
      $region47: #{tpu_custom_call.1} parent=5 // pred_region
        %s276 = ssub.s32 %s17, 1
        %s277 = sand.u32 %s30, 1
        %s278 = scalar_lea.sflag [#allocation3], %s277
        %s279 = sand.u32 %s30, 1
        %s280 = smul.addr %s279, 8
        %s281 = scalar_lea.vmem [#allocation2], %s280
        // Predicated region
        $region49: #{tpu_custom_call.1} parent=47 // pred_check
          %p282 = pneg %p43
        $region50: #{tpu_custom_call.1} parent=47 // pred_check_branch
          %284 = sbr.rel (%p282) target = $region52
        $region51: #{tpu_custom_call.1} parent=47 // pred_region
          %285 = dma.done %s278, 128
        $region52: #{tpu_custom_call.1} parent=47 // pred_fallthru
          _
        // Predicated region
        $region53: #{tpu_custom_call.1} parent=47 // pred_check
          %p286 = pneg %p148
        $region54: #{tpu_custom_call.1} parent=47 // pred_check_branch
          %288 = sbr.rel (%p286) target = $region56
        $region55: #{tpu_custom_call.1} parent=47 // pred_region
          %289 = dma.done [#allocation5], 2048
        $region56: #{tpu_custom_call.1} parent=47 // pred_fallthru
          _
        // Predicated region
        $region57: #{tpu_custom_call.1} parent=47 // pred_check
          %p290 = pneg %p169
        $region58: #{tpu_custom_call.1} parent=47 // pred_check_branch
          %292 = sbr.rel (%p290) target = $region60
        $region59: #{tpu_custom_call.1} parent=47 // pred_region
          %293 = dma.done [#allocation5], 2048
        $region60: #{tpu_custom_call.1} parent=47 // pred_fallthru
          _
        %s294 = sand.u32 %s30, 1
        %s295 = scalar_lea.sflag [#allocation3], %s294
        %s296 = sand.u32 %s30, 1
        %s297 = smul.addr %s296, 8
        %s298 = scalar_lea.vmem [#allocation2], %s297
        %p299 = pneg %p43
        %p300 = pneg %p40
        %p301 = pneg %p64
        %p302 = pneg %p61
        %p303 = pneg %p85
        %p304 = pneg %p82
        %p305 = pneg %p106
        %p306 = pneg %p103
        %p307 = pneg %p127
        %p308 = pneg %p124
        %p309 = pneg %p148
        %p310 = pneg %p145
        %p311 = pneg %p169
        %p312 = pneg %p166
        %p313 = pneg %p195
        %p314 = pneg %p192
        %p315 = scmp.lt.s32.totalorder %s22, 1
        %s316 = scalar_select %p315, %s22, 1
        %s317 = smul.addr %s316, 8
        %s318 = scalar_lea.vmem %s7, %s317
        %p319 = scmp.lt.s32.totalorder %s22, 1
        %s320 = scalar_select %p319, %s22, 1
        %s321 = smul.addr %s320, 8
        %s322 = scalar_lea.vmem %s7, %s321
        %v324 = vld [vmem:[%s4] sm:$0xff]
        %v325 = vld [vmem:[%s281] sm:$0xff]
        %v326 = vpack.c.bf16 %v325, %v325
        %v327 = vld [vmem:[%s1] sm:$0xf]
        %v328 = vld [vmem:[%s1 + $0x4] sm:$0x1]
        %v329 = vlaneseq
        %v330 = vshrl.u32 %v329, 7
        %v331 = vsub.s32 0, %v330
        %v332 = vrot.slane %v324, %v331
        %v335 = vunpack.c.l.b16 %v327
        %v336 = vunpack.c.l.b16 %v328
        %v337 = vpack.c.b16 %v336, %v335
        %vm338 = vcmask 80896
        %v340 = vsel %vm338, %v326, 0
        %vm342 = vcmask 1044480
        %v344 = vsel %vm342, %v337, 0
        %346 = vmatprep.subr.bf16.mxu0 0
        %347 = vmatpush1.bf16.msra.mxu0 %v344
        %348 = vmatprep.subr.bf16.mxu0 0
        %349 = vmatpush1.bf16.msra.mxu0 0
        %350 = vmatprep.subr.bf16.mxu0 0
        %351 = vmatpush1.bf16.msra.mxu0 0
        %352 = vmatprep.subr.bf16.mxu0 0
        %353 = vmatpush1.bf16.msra.mxu0 0
        %354 = vmatprep.subr.bf16.mxu0 0
        %355 = vmatpush1.bf16.msra.mxu0 0
        %356 = vmatprep.subr.bf16.mxu0 0
        %357 = vmatpush1.bf16.msra.mxu0 0
        %358 = vmatprep.subr.bf16.mxu0 0
        %359 = vmatpush1.bf16.msra.mxu0 0
        %360 = vmatprep.subr.bf16.mxu0 0
        %361 = vmatpush1.bf16.msra.mxu0 0
        %362 = vmatprep.subr.bf16.mxu0 0
        %363 = vmatpush1.bf16.msra.mxu0 0
        %364 = vmatprep.subr.bf16.mxu0 0
        %365 = vmatpush1.bf16.msra.mxu0 0
        %366 = vmatprep.subr.bf16.mxu0 0
        %367 = vmatpush1.bf16.msra.mxu0 0
        %368 = vmatprep.subr.bf16.mxu0 0
        %369 = vmatpush1.bf16.msra.mxu0 0
        %370 = vmatprep.subr.bf16.mxu0 0
        %371 = vmatpush1.bf16.msra.mxu0 0
        %372 = vmatprep.subr.bf16.mxu0 0
        %373 = vmatpush1.bf16.msra.mxu0 0
        %374 = vmatprep.subr.bf16.mxu0 0
        %375 = vmatpush1.bf16.msra.mxu0 0
        %376 = vmatprep.subr.bf16.mxu0 0
        %377 = vmatpush1.bf16.msra.mxu0 0
        %378 = vmatprep.mubr.bf16.mxu0 0
        %379 = vmatmul.mubr.bf16.gmra.mrb[0].mxu0 %v340
        %v380 = vpop.f32.mrb[0].mxu0
        %v381 = vadd.f32 %v332, %v380
        %v382 = vpop.f32.mrb[0].mxu0
        %v383 = vpop.f32.mrb[0].mxu0
        %v384 = vpop.f32.mrb[0].mxu0
        %385 = vdwg.mxu0
        %v386 = vld [vmem:[#allocation4] sm:$0xff]
        %v387 = vld [vmem:[#allocation4 + $0x8] sm:$0xff]
        %v388 = vld [vmem:[#allocation4 + $0x10] sm:$0xff]
        %v389 = vld [vmem:[#allocation4 + $0x18] sm:$0xff]
        %v390 = vld [vmem:[#allocation4 + $0x20] sm:$0xff]
        %v391 = vld [vmem:[#allocation4 + $0x28] sm:$0xff]
        %v392 = vld [vmem:[#allocation4 + $0x30] sm:$0xff]
        %v393 = vld [vmem:[#allocation4 + $0x38] sm:$0xff]
        %v394 = vld [vmem:[#allocation4 + $0x40] sm:$0xff]
        %v395 = vld [vmem:[#allocation4 + $0x48] sm:$0xff]
        %v396 = vld [vmem:[#allocation4 + $0x50] sm:$0xff]
        %v397 = vld [vmem:[#allocation4 + $0x58] sm:$0xff]
        %v398 = vld [vmem:[#allocation4 + $0x60] sm:$0xff]
        %v399 = vld [vmem:[#allocation4 + $0x68] sm:$0xff]
        %v400 = vld [vmem:[#allocation4 + $0x70] sm:$0xff]
        %v401 = vld [vmem:[#allocation4 + $0x78] sm:$0xff]
        %402 = vmatprep.subr.mxu0 0.0
        %403 = vmatpush1.msra.mxu0 %v386
        %404 = vmatprep.subr.mxu0 0.0
        %405 = vmatpush1.msra.mxu0 %v387
        %406 = vmatprep.subr.mxu0 0.0
        %407 = vmatpush1.msra.mxu0 %v388
        %408 = vmatprep.subr.mxu0 0.0
        %409 = vmatpush1.msra.mxu0 %v389
        %410 = vmatprep.subr.mxu0 0.0
        %411 = vmatpush1.msra.mxu0 %v390
        %412 = vmatprep.subr.mxu0 0.0
        %413 = vmatpush1.msra.mxu0 %v391
        %414 = vmatprep.subr.mxu0 0.0
        %415 = vmatpush1.msra.mxu0 %v392
        %416 = vmatprep.subr.mxu0 0.0
        %417 = vmatpush1.msra.mxu0 %v393
        %418 = vmatprep.subr.mxu0 0.0
        %419 = vmatpush1.msra.mxu0 %v394
        %420 = vmatprep.subr.mxu0 0.0
        %421 = vmatpush1.msra.mxu0 %v395
        %422 = vmatprep.subr.mxu0 0.0
        %423 = vmatpush1.msra.mxu0 %v396
        %424 = vmatprep.subr.mxu0 0.0
        %425 = vmatpush1.msra.mxu0 %v397
        %426 = vmatprep.subr.mxu0 0.0
        %427 = vmatpush1.msra.mxu0 %v398
        %428 = vmatprep.subr.mxu0 0.0
        %429 = vmatpush1.msra.mxu0 %v399
        %430 = vmatprep.subr.mxu0 0.0
        %431 = vmatpush1.msra.mxu0 %v400
        %432 = vmatprep.subr.mxu0 0.0
        %433 = vmatpush1.msra.mxu0 %v401
        %434 = vmatprep.subr.mxu0 0.0
        %435 = vmatpush1.msra.mxu0 0.0
        %436 = vmatprep.subr.mxu0 0.0
        %437 = vmatpush1.msra.mxu0 0.0
        %438 = vmatprep.subr.mxu0 0.0
        %439 = vmatpush1.msra.mxu0 0.0
        %440 = vmatprep.subr.mxu0 0.0
        %441 = vmatpush1.msra.mxu0 0.0
        %442 = vmatprep.subr.mxu0 0.0
        %443 = vmatpush1.msra.mxu0 0.0
        %444 = vmatprep.subr.mxu0 0.0
        %445 = vmatpush1.msra.mxu0 0.0
        %446 = vmatprep.subr.mxu0 0.0
        %447 = vmatpush1.msra.mxu0 0.0
        %448 = vmatprep.subr.mxu0 0.0
        %449 = vmatpush1.msra.mxu0 0.0
        %450 = vmatprep.subr.mxu0 0.0
        %451 = vmatpush1.msra.mxu0 0.0
        %452 = vmatprep.subr.mxu0 0.0
        %453 = vmatpush1.msra.mxu0 0.0
        %454 = vmatprep.subr.mxu0 0.0
        %455 = vmatpush1.msra.mxu0 0.0
        %456 = vmatprep.subr.mxu0 0.0
        %457 = vmatpush1.msra.mxu0 0.0
        %458 = vmatprep.subr.mxu0 0.0
        %459 = vmatpush1.msra.mxu0 0.0
        %460 = vmatprep.subr.mxu0 0.0
        %461 = vmatpush1.msra.mxu0 0.0
        %462 = vmatprep.subr.mxu0 0.0
        %463 = vmatpush1.msra.mxu0 0.0
        %464 = vmatprep.subr.mxu0 0.0
        %465 = vmatpush1.msra.mxu0 0.0
        %466 = vmatprep.mubr.f32.mxu0 0.0
        %467 = vmatmul.mubr.f32.gmra.mrb[0].mxu0 %v381
        %v468 = vpop.f32.mrb[0].mxu0
        %v469 = vadd.f32 0.0, %v468
        %v470 = vpop.f32.mrb[0].mxu0
        %471 = vdwg.mxu0
        %v472 = vmul.f32 %v381, %v381
        %473 = vmatprep.subr.mxu0 0.0
        %474 = vmatpush1.msra.mxu0 %v386
        %475 = vmatprep.subr.mxu0 0.0
        %476 = vmatpush1.msra.mxu0 %v387
        %477 = vmatprep.subr.mxu0 0.0
        %478 = vmatpush1.msra.mxu0 %v388
        %479 = vmatprep.subr.mxu0 0.0
        %480 = vmatpush1.msra.mxu0 %v389
        %481 = vmatprep.subr.mxu0 0.0
        %482 = vmatpush1.msra.mxu0 %v390
        %483 = vmatprep.subr.mxu0 0.0
        %484 = vmatpush1.msra.mxu0 %v391
        %485 = vmatprep.subr.mxu0 0.0
        %486 = vmatpush1.msra.mxu0 %v392
        %487 = vmatprep.subr.mxu0 0.0
        %488 = vmatpush1.msra.mxu0 %v393
        %489 = vmatprep.subr.mxu0 0.0
        %490 = vmatpush1.msra.mxu0 %v394
        %491 = vmatprep.subr.mxu0 0.0
        %492 = vmatpush1.msra.mxu0 %v395
        %493 = vmatprep.subr.mxu0 0.0
        %494 = vmatpush1.msra.mxu0 %v396
        %495 = vmatprep.subr.mxu0 0.0
        %496 = vmatpush1.msra.mxu0 %v397
        %497 = vmatprep.subr.mxu0 0.0
        %498 = vmatpush1.msra.mxu0 %v398
        %499 = vmatprep.subr.mxu0 0.0
        %500 = vmatpush1.msra.mxu0 %v399
        %501 = vmatprep.subr.mxu0 0.0
        %502 = vmatpush1.msra.mxu0 %v400
        %503 = vmatprep.subr.mxu0 0.0
        %504 = vmatpush1.msra.mxu0 %v401
        %505 = vmatprep.subr.mxu0 0.0
        %506 = vmatpush1.msra.mxu0 0.0
        %507 = vmatprep.subr.mxu0 0.0
        %508 = vmatpush1.msra.mxu0 0.0
        %509 = vmatprep.subr.mxu0 0.0
        %510 = vmatpush1.msra.mxu0 0.0
        %511 = vmatprep.subr.mxu0 0.0
        %512 = vmatpush1.msra.mxu0 0.0
        %513 = vmatprep.subr.mxu0 0.0
        %514 = vmatpush1.msra.mxu0 0.0
        %515 = vmatprep.subr.mxu0 0.0
        %516 = vmatpush1.msra.mxu0 0.0
        %517 = vmatprep.subr.mxu0 0.0
        %518 = vmatpush1.msra.mxu0 0.0
        %519 = vmatprep.subr.mxu0 0.0
        %520 = vmatpush1.msra.mxu0 0.0
        %521 = vmatprep.subr.mxu0 0.0
        %522 = vmatpush1.msra.mxu0 0.0
        %523 = vmatprep.subr.mxu0 0.0
        %524 = vmatpush1.msra.mxu0 0.0
        %525 = vmatprep.subr.mxu0 0.0
        %526 = vmatpush1.msra.mxu0 0.0
        %527 = vmatprep.subr.mxu0 0.0
        %528 = vmatpush1.msra.mxu0 0.0
        %529 = vmatprep.subr.mxu0 0.0
        %530 = vmatpush1.msra.mxu0 0.0
        %531 = vmatprep.subr.mxu0 0.0
        %532 = vmatpush1.msra.mxu0 0.0
        %533 = vmatprep.subr.mxu0 0.0
        %534 = vmatpush1.msra.mxu0 0.0
        %535 = vmatprep.subr.mxu0 0.0
        %536 = vmatpush1.msra.mxu0 0.0
        %537 = vmatprep.mubr.f32.mxu0 0.0
        %538 = vmatmul.mubr.f32.gmra.mrb[0].mxu0 %v472
        %v539 = vpop.f32.mrb[0].mxu0
        %v540 = vadd.f32 0.0, %v539
        %v541 = vpop.f32.mrb[0].mxu0
        %542 = vdwg.mxu0
        %v543 = vmul.f32 %v469, 0.03125
        %v544 = vmul.f32 %v540, 0.03125
        %v545 = vmul.f32 %v543, %v543
        %v546 = vsub.f32 %v544, %v545
        %v547 = vmax.f32 %v546, 0.0
        %v548 = vsub.f32 %v381, %v543
        %v549 = vadd.f32 %v547, 1e-05
        %v550 = vrsqrt.pop %v549
        %v551 = vmul.f32 %v548, %v550
        %v552 = vlaneseq
        %v553 = vshrl.u32 %v552, 7
        %v554 = vsub.s32 1, %v553
        %v555 = vrot.slane %v324, %v554
        %v556 = vmul.f32 %v551, %v555
        %v557 = vlaneseq
        %v558 = vshrl.u32 %v557, 7
        %v559 = vsub.s32 2, %v558
        %v560 = vrot.slane %v324, %v559
        %v561 = vadd.f32 %v556, %v560
        %v562 = vtanh.pop %v561
        %v563 = vpack.c.bf16 %v562, %v562
        %v564 = vld [vmem:[%s2] sm:$0xf]
        %v565 = vld [vmem:[%s2 + $0x4] sm:$0xf]
        %v566 = vld [vmem:[%s2 + $0x8] sm:$0xf]
        %v567 = vld [vmem:[%s2 + $0xc] sm:$0xf]
        %v568 = vld [vmem:[%s2 + $0x10] sm:$0xf]
        %v569 = vld [vmem:[%s2 + $0x14] sm:$0xf]
        %v570 = vld [vmem:[%s2 + $0x18] sm:$0xf]
        %v571 = vld [vmem:[%s2 + $0x1c] sm:$0xf]
        %v572 = vld [vmem:[%s2 + $0x20] sm:$0xf]
        %v573 = vld [vmem:[%s2 + $0x24] sm:$0xf]
        %v574 = vld [vmem:[%s2 + $0x28] sm:$0xf]
        %v575 = vld [vmem:[%s2 + $0x2c] sm:$0xf]
        %v576 = vld [vmem:[%s2 + $0x30] sm:$0xf]
        %v577 = vld [vmem:[%s2 + $0x34] sm:$0xf]
        %v578 = vld [vmem:[%s2 + $0x38] sm:$0xf]
        %v579 = vld [vmem:[%s2 + $0x3c] sm:$0xf]
        %v580 = vlaneseq
        %v581 = vshrl.u32 %v580, 7
        %v582 = vsub.s32 3, %v581
        %v583 = vrot.slane %v324, %v582
        %v600 = vunpack.c.l.b16 %v564
        %v601 = vunpack.c.l.b16 %v565
        %v602 = vunpack.c.l.b16 %v566
        %v603 = vunpack.c.l.b16 %v567
        %v604 = vunpack.c.l.b16 %v568
        %v605 = vunpack.c.l.b16 %v569
        %v606 = vunpack.c.l.b16 %v570
        %v607 = vunpack.c.l.b16 %v571
        %v608 = vunpack.c.l.b16 %v572
        %v609 = vunpack.c.l.b16 %v573
        %v610 = vunpack.c.l.b16 %v574
        %v611 = vunpack.c.l.b16 %v575
        %v612 = vunpack.c.l.b16 %v576
        %v613 = vunpack.c.l.b16 %v577
        %v614 = vunpack.c.l.b16 %v578
        %v615 = vunpack.c.l.b16 %v579
        %v616 = vpack.c.b16 %v601, %v600
        %v617 = vpack.c.b16 %v603, %v602
        %v618 = vpack.c.b16 %v605, %v604
        %v619 = vpack.c.b16 %v607, %v606
        %v620 = vpack.c.b16 %v609, %v608
        %v621 = vpack.c.b16 %v611, %v610
        %v622 = vpack.c.b16 %v613, %v612
        %v623 = vpack.c.b16 %v615, %v614
        %632 = vmatprep.subr.bf16.mxu0 0
        %633 = vmatpush1.bf16.msra.mxu0 %v616
        %634 = vmatprep.subr.bf16.mxu0 0
        %635 = vmatpush1.bf16.msra.mxu0 %v617
        %636 = vmatprep.subr.bf16.mxu0 0
        %637 = vmatpush1.bf16.msra.mxu0 %v618
        %638 = vmatprep.subr.bf16.mxu0 0
        %639 = vmatpush1.bf16.msra.mxu0 %v619
        %640 = vmatprep.subr.bf16.mxu0 0
        %641 = vmatpush1.bf16.msra.mxu0 %v620
        %642 = vmatprep.subr.bf16.mxu0 0
        %643 = vmatpush1.bf16.msra.mxu0 %v621
        %644 = vmatprep.subr.bf16.mxu0 0
        %645 = vmatpush1.bf16.msra.mxu0 %v622
        %646 = vmatprep.subr.bf16.mxu0 0
        %647 = vmatpush1.bf16.msra.mxu0 %v623
        %648 = vmatprep.subr.bf16.mxu0 0
        %649 = vmatpush1.bf16.msra.mxu0 0
        %650 = vmatprep.subr.bf16.mxu0 0
        %651 = vmatpush1.bf16.msra.mxu0 0
        %652 = vmatprep.subr.bf16.mxu0 0
        %653 = vmatpush1.bf16.msra.mxu0 0
        %654 = vmatprep.subr.bf16.mxu0 0
        %655 = vmatpush1.bf16.msra.mxu0 0
        %656 = vmatprep.subr.bf16.mxu0 0
        %657 = vmatpush1.bf16.msra.mxu0 0
        %658 = vmatprep.subr.bf16.mxu0 0
        %659 = vmatpush1.bf16.msra.mxu0 0
        %660 = vmatprep.subr.bf16.mxu0 0
        %661 = vmatpush1.bf16.msra.mxu0 0
        %662 = vmatprep.subr.bf16.mxu0 0
        %663 = vmatpush1.bf16.msra.mxu0 0
        %664 = vmatprep.mubr.bf16.mxu0 0
        %665 = vmatmul.mubr.bf16.gmra.mrb[0].mxu0 %v563
        %v666 = vpop.f32.mrb[0].mxu0
        %v667 = vadd.f32 %v583, %v666
        %v668 = vpop.f32.mrb[0].mxu0
        %v669 = vpop.f32.mrb[0].mxu0
        %v670 = vpop.f32.mrb[0].mxu0
        %671 = vdwg.mxu0
        %v672 = vld [vmem:[#allocation6] sm:$0xff]
        %v673 = vld [vmem:[#allocation6 + $0x8] sm:$0xff]
        %v674 = vld [vmem:[#allocation6 + $0x10] sm:$0xff]
        %v675 = vld [vmem:[#allocation6 + $0x18] sm:$0xff]
        %v676 = vld [vmem:[#allocation6 + $0x20] sm:$0xff]
        %v677 = vld [vmem:[#allocation6 + $0x28] sm:$0xff]
        %v678 = vld [vmem:[#allocation6 + $0x30] sm:$0xff]
        %v679 = vld [vmem:[#allocation6 + $0x38] sm:$0xff]
        %v680 = vld [vmem:[#allocation6 + $0x40] sm:$0xff]
        %v681 = vld [vmem:[#allocation6 + $0x48] sm:$0xff]
        %v682 = vld [vmem:[#allocation6 + $0x50] sm:$0xff]
        %v683 = vld [vmem:[#allocation6 + $0x58] sm:$0xff]
        %v684 = vld [vmem:[#allocation6 + $0x60] sm:$0xff]
        %v685 = vld [vmem:[#allocation6 + $0x68] sm:$0xff]
        %v686 = vld [vmem:[#allocation6 + $0x70] sm:$0xff]
        %v687 = vld [vmem:[#allocation6 + $0x78] sm:$0xff]
        %688 = vmatprep.subr.mxu0 0.0
        %689 = vmatpush1.msra.mxu0 %v672
        %690 = vmatprep.subr.mxu0 0.0
        %691 = vmatpush1.msra.mxu0 %v673
        %692 = vmatprep.subr.mxu0 0.0
        %693 = vmatpush1.msra.mxu0 %v674
        %694 = vmatprep.subr.mxu0 0.0
        %695 = vmatpush1.msra.mxu0 %v675
        %696 = vmatprep.subr.mxu0 0.0
        %697 = vmatpush1.msra.mxu0 %v676
        %698 = vmatprep.subr.mxu0 0.0
        %699 = vmatpush1.msra.mxu0 %v677
        %700 = vmatprep.subr.mxu0 0.0
        %701 = vmatpush1.msra.mxu0 %v678
        %702 = vmatprep.subr.mxu0 0.0
        %703 = vmatpush1.msra.mxu0 %v679
        %704 = vmatprep.subr.mxu0 0.0
        %705 = vmatpush1.msra.mxu0 %v680
        %706 = vmatprep.subr.mxu0 0.0
        %707 = vmatpush1.msra.mxu0 %v681
        %708 = vmatprep.subr.mxu0 0.0
        %709 = vmatpush1.msra.mxu0 %v682
        %710 = vmatprep.subr.mxu0 0.0
        %711 = vmatpush1.msra.mxu0 %v683
        %712 = vmatprep.subr.mxu0 0.0
        %713 = vmatpush1.msra.mxu0 %v684
        %714 = vmatprep.subr.mxu0 0.0
        %715 = vmatpush1.msra.mxu0 %v685
        %716 = vmatprep.subr.mxu0 0.0
        %717 = vmatpush1.msra.mxu0 %v686
        %718 = vmatprep.subr.mxu0 0.0
        %719 = vmatpush1.msra.mxu0 %v687
        %720 = vmatprep.subr.mxu0 0.0
        %721 = vmatpush1.msra.mxu0 0.0
        %722 = vmatprep.subr.mxu0 0.0
        %723 = vmatpush1.msra.mxu0 0.0
        %724 = vmatprep.subr.mxu0 0.0
        %725 = vmatpush1.msra.mxu0 0.0
        %726 = vmatprep.subr.mxu0 0.0
        %727 = vmatpush1.msra.mxu0 0.0
        %728 = vmatprep.subr.mxu0 0.0
        %729 = vmatpush1.msra.mxu0 0.0
        %730 = vmatprep.subr.mxu0 0.0
        %731 = vmatpush1.msra.mxu0 0.0
        %732 = vmatprep.subr.mxu0 0.0
        %733 = vmatpush1.msra.mxu0 0.0
        %734 = vmatprep.subr.mxu0 0.0
        %735 = vmatpush1.msra.mxu0 0.0
        %736 = vmatprep.subr.mxu0 0.0
        %737 = vmatpush1.msra.mxu0 0.0
        %738 = vmatprep.subr.mxu0 0.0
        %739 = vmatpush1.msra.mxu0 0.0
        %740 = vmatprep.subr.mxu0 0.0
        %741 = vmatpush1.msra.mxu0 0.0
        %742 = vmatprep.subr.mxu0 0.0
        %743 = vmatpush1.msra.mxu0 0.0
        %744 = vmatprep.subr.mxu0 0.0
        %745 = vmatpush1.msra.mxu0 0.0
        %746 = vmatprep.subr.mxu0 0.0
        %747 = vmatpush1.msra.mxu0 0.0
        %748 = vmatprep.subr.mxu0 0.0
        %749 = vmatpush1.msra.mxu0 0.0
        %750 = vmatprep.subr.mxu0 0.0
        %751 = vmatpush1.msra.mxu0 0.0
        %752 = vmatprep.mubr.f32.mxu0 0.0
        %753 = vmatmul.mubr.f32.gmra.mrb[0].mxu0 %v667
        %v754 = vpop.f32.mrb[0].mxu0
        %v755 = vadd.f32 0.0, %v754
        %v756 = vpop.f32.mrb[0].mxu0
        %757 = vdwg.mxu0
        %v758 = vmul.f32 %v667, %v667
        %759 = vmatprep.subr.mxu0 0.0
        %760 = vmatpush1.msra.mxu0 %v672
        %761 = vmatprep.subr.mxu0 0.0
        %762 = vmatpush1.msra.mxu0 %v673
        %763 = vmatprep.subr.mxu0 0.0
        %764 = vmatpush1.msra.mxu0 %v674
        %765 = vmatprep.subr.mxu0 0.0
        %766 = vmatpush1.msra.mxu0 %v675
        %767 = vmatprep.subr.mxu0 0.0
        %768 = vmatpush1.msra.mxu0 %v676
        %769 = vmatprep.subr.mxu0 0.0
        %770 = vmatpush1.msra.mxu0 %v677
        %771 = vmatprep.subr.mxu0 0.0
        %772 = vmatpush1.msra.mxu0 %v678
        %773 = vmatprep.subr.mxu0 0.0
        %774 = vmatpush1.msra.mxu0 %v679
        %775 = vmatprep.subr.mxu0 0.0
        %776 = vmatpush1.msra.mxu0 %v680
        %777 = vmatprep.subr.mxu0 0.0
        %778 = vmatpush1.msra.mxu0 %v681
        %779 = vmatprep.subr.mxu0 0.0
        %780 = vmatpush1.msra.mxu0 %v682
        %781 = vmatprep.subr.mxu0 0.0
        %782 = vmatpush1.msra.mxu0 %v683
        %783 = vmatprep.subr.mxu0 0.0
        %784 = vmatpush1.msra.mxu0 %v684
        %785 = vmatprep.subr.mxu0 0.0
        %786 = vmatpush1.msra.mxu0 %v685
        %787 = vmatprep.subr.mxu0 0.0
        %788 = vmatpush1.msra.mxu0 %v686
        %789 = vmatprep.subr.mxu0 0.0
        %790 = vmatpush1.msra.mxu0 %v687
        %791 = vmatprep.subr.mxu0 0.0
        %792 = vmatpush1.msra.mxu0 0.0
        %793 = vmatprep.subr.mxu0 0.0
        %794 = vmatpush1.msra.mxu0 0.0
        %795 = vmatprep.subr.mxu0 0.0
        %796 = vmatpush1.msra.mxu0 0.0
        %797 = vmatprep.subr.mxu0 0.0
        %798 = vmatpush1.msra.mxu0 0.0
        %799 = vmatprep.subr.mxu0 0.0
        %800 = vmatpush1.msra.mxu0 0.0
        %801 = vmatprep.subr.mxu0 0.0
        %802 = vmatpush1.msra.mxu0 0.0
        %803 = vmatprep.subr.mxu0 0.0
        %804 = vmatpush1.msra.mxu0 0.0
        %805 = vmatprep.subr.mxu0 0.0
        %806 = vmatpush1.msra.mxu0 0.0
        %807 = vmatprep.subr.mxu0 0.0
        %808 = vmatpush1.msra.mxu0 0.0
        %809 = vmatprep.subr.mxu0 0.0
        %810 = vmatpush1.msra.mxu0 0.0
        %811 = vmatprep.subr.mxu0 0.0
        %812 = vmatpush1.msra.mxu0 0.0
        %813 = vmatprep.subr.mxu0 0.0
        %814 = vmatpush1.msra.mxu0 0.0
        %815 = vmatprep.subr.mxu0 0.0
        %816 = vmatpush1.msra.mxu0 0.0
        %817 = vmatprep.subr.mxu0 0.0
        %818 = vmatpush1.msra.mxu0 0.0
        %819 = vmatprep.subr.mxu0 0.0
        %820 = vmatpush1.msra.mxu0 0.0
        %821 = vmatprep.subr.mxu0 0.0
        %822 = vmatpush1.msra.mxu0 0.0
        %823 = vmatprep.mubr.f32.mxu0 0.0
        %824 = vmatmul.mubr.f32.gmra.mrb[0].mxu0 %v758
        %v825 = vpop.f32.mrb[0].mxu0
        %v826 = vadd.f32 0.0, %v825
        %v827 = vpop.f32.mrb[0].mxu0
        %828 = vdwg.mxu0
        %v829 = vmul.f32 %v755, 0.03125
        %v830 = vmul.f32 %v826, 0.03125
        %v831 = vmul.f32 %v829, %v829
        %v832 = vsub.f32 %v830, %v831
        %v833 = vmax.f32 %v832, 0.0
        %v834 = vsub.f32 %v667, %v829
        %v835 = vadd.f32 %v833, 1e-05
        %v836 = vrsqrt.pop %v835
        %v837 = vmul.f32 %v834, %v836
        %v838 = vlaneseq
        %v839 = vshrl.u32 %v838, 7
        %v840 = vsub.s32 4, %v839
        %v841 = vrot.slane %v324, %v840
        %v842 = vmul.f32 %v837, %v841
        %v843 = vlaneseq
        %v844 = vshrl.u32 %v843, 7
        %v845 = vsub.s32 5, %v844
        %v846 = vrot.slane %v324, %v845
        %v847 = vadd.f32 %v842, %v846
        %v848 = vtanh.pop %v847
        %v849 = vpack.c.bf16 %v848, %v848
        %v850 = vld [vmem:[%s3] sm:$0xf]
        %v851 = vld [vmem:[%s3 + $0x4] sm:$0xf]
        %v852 = vld [vmem:[%s3 + $0x8] sm:$0xf]
        %v853 = vld [vmem:[%s3 + $0xc] sm:$0xf]
        %v854 = vld [vmem:[%s3 + $0x10] sm:$0xf]
        %v855 = vld [vmem:[%s3 + $0x14] sm:$0xf]
        %v856 = vld [vmem:[%s3 + $0x18] sm:$0xf]
        %v857 = vld [vmem:[%s3 + $0x1c] sm:$0xf]
        %v858 = vld [vmem:[%s3 + $0x20] sm:$0xf]
        %v859 = vld [vmem:[%s3 + $0x24] sm:$0xf]
        %v860 = vld [vmem:[%s3 + $0x28] sm:$0xf]
        %v861 = vld [vmem:[%s3 + $0x2c] sm:$0xf]
        %v862 = vld [vmem:[%s3 + $0x30] sm:$0xf]
        %v863 = vld [vmem:[%s3 + $0x34] sm:$0xf]
        %v864 = vld [vmem:[%s3 + $0x38] sm:$0xf]
        %v865 = vld [vmem:[%s3 + $0x3c] sm:$0xf]
        %v866 = vlaneseq
        %v867 = vshrl.u32 %v866, 7
        %v868 = vsub.s32 6, %v867
        %v869 = vrot.slane %v324, %v868
        %v886 = vunpack.c.l.b16 %v850
        %v887 = vunpack.c.l.b16 %v851
        %v888 = vunpack.c.l.b16 %v852
        %v889 = vunpack.c.l.b16 %v853
        %v890 = vunpack.c.l.b16 %v854
        %v891 = vunpack.c.l.b16 %v855
        %v892 = vunpack.c.l.b16 %v856
        %v893 = vunpack.c.l.b16 %v857
        %v894 = vunpack.c.l.b16 %v858
        %v895 = vunpack.c.l.b16 %v859
        %v896 = vunpack.c.l.b16 %v860
        %v897 = vunpack.c.l.b16 %v861
        %v898 = vunpack.c.l.b16 %v862
        %v899 = vunpack.c.l.b16 %v863
        %v900 = vunpack.c.l.b16 %v864
        %v901 = vunpack.c.l.b16 %v865
        %v902 = vpack.c.b16 %v887, %v886
        %v903 = vpack.c.b16 %v889, %v888
        %v904 = vpack.c.b16 %v891, %v890
        %v905 = vpack.c.b16 %v893, %v892
        %v906 = vpack.c.b16 %v895, %v894
        %v907 = vpack.c.b16 %v897, %v896
        %v908 = vpack.c.b16 %v899, %v898
        %v909 = vpack.c.b16 %v901, %v900
        %918 = vmatprep.subr.bf16.mxu0 0
        %919 = vmatpush1.bf16.msra.mxu0 %v902
        %920 = vmatprep.subr.bf16.mxu0 0
        %921 = vmatpush1.bf16.msra.mxu0 %v903
        %922 = vmatprep.subr.bf16.mxu0 0
        %923 = vmatpush1.bf16.msra.mxu0 %v904
        %924 = vmatprep.subr.bf16.mxu0 0
        %925 = vmatpush1.bf16.msra.mxu0 %v905
        %926 = vmatprep.subr.bf16.mxu0 0
        %927 = vmatpush1.bf16.msra.mxu0 %v906
        %928 = vmatprep.subr.bf16.mxu0 0
        %929 = vmatpush1.bf16.msra.mxu0 %v907
        %930 = vmatprep.subr.bf16.mxu0 0
        %931 = vmatpush1.bf16.msra.mxu0 %v908
        %932 = vmatprep.subr.bf16.mxu0 0
        %933 = vmatpush1.bf16.msra.mxu0 %v909
        %934 = vmatprep.subr.bf16.mxu0 0
        %935 = vmatpush1.bf16.msra.mxu0 0
        %936 = vmatprep.subr.bf16.mxu0 0
        %937 = vmatpush1.bf16.msra.mxu0 0
        %938 = vmatprep.subr.bf16.mxu0 0
        %939 = vmatpush1.bf16.msra.mxu0 0
        %940 = vmatprep.subr.bf16.mxu0 0
        %941 = vmatpush1.bf16.msra.mxu0 0
        %942 = vmatprep.subr.bf16.mxu0 0
        %943 = vmatpush1.bf16.msra.mxu0 0
        %944 = vmatprep.subr.bf16.mxu0 0
        %945 = vmatpush1.bf16.msra.mxu0 0
        %946 = vmatprep.subr.bf16.mxu0 0
        %947 = vmatpush1.bf16.msra.mxu0 0
        %948 = vmatprep.subr.bf16.mxu0 0
        %949 = vmatpush1.bf16.msra.mxu0 0
        %950 = vmatprep.mubr.bf16.mxu0 0
        %951 = vmatmul.mubr.bf16.gmra.mrb[0].mxu0 %v849
        %v952 = vpop.f32.mrb[0].mxu0
        %v953 = vadd.f32 %v869, %v952
        %v954 = vpop.f32.mrb[0].mxu0
        %v955 = vpop.f32.mrb[0].mxu0
        %v956 = vpop.f32.mrb[0].mxu0
        %957 = vdwg.mxu0
        %vm958 = vcmask 31744
        %959 = vst.msk [vmem:[%s322] sm:$0xff] %vm958, %v953
        %p960 = scmp.lt.s32.totalorder %s22, 1
        %s961 = scalar_select %p960, %s22, 1
        %s962 = smul.addr %s961, 8
        %s963 = scalar_lea.vmem %s7, %s962
        // Predicated region
        $region61: #{tpu_custom_call.1} parent=47 // pred_check
          %p964 = pneg %p192
        $region62: #{tpu_custom_call.1} parent=47 // pred_check_branch
          %966 = sbr.rel (%p964) target = $region64
        $region63: #{tpu_custom_call.1} parent=47 // pred_region
          _
        $region64: #{tpu_custom_call.1} parent=47 // pred_fallthru
          _
      $region48: #{tpu_custom_call.1} parent=5 // pred_fallthru
        _
      %p967 = scmp.le.s32.totalorder 2, %s17
      // Predicated region
      $region65: #{tpu_custom_call.1} parent=5 // pred_check
        %p968 = pneg %p967
      $region66: #{tpu_custom_call.1} parent=5 // pred_check_branch
        %970 = sbr.rel (%p968) target = $region68
      $region67: #{tpu_custom_call.1} parent=5 // pred_region
        %s971 = ssub.s32 %s17, 2
        // Predicated region
        $region69: #{tpu_custom_call.1} parent=67 // pred_check
          %p972 = pneg %p198
        $region70: #{tpu_custom_call.1} parent=67 // pred_check_branch
          %974 = sbr.rel (%p972) target = $region72
        $region71: #{tpu_custom_call.1} parent=67 // pred_region
          %p975 = scmp.lt.s32.totalorder %s23, 1
          %s976 = scalar_select %p975, %s23, 1
          %s977 = smul.addr %s976, 8
          %s978 = scalar_lea.vmem %s7, %s977
        $region72: #{tpu_custom_call.1} parent=67 // pred_fallthru
          _
      $region68: #{tpu_custom_call.1} parent=5 // pred_fallthru
        _
    $region6: #{tpu_custom_call.1} parent=1 // loop_footer
      %s21 = sadd.s32 1, %s17
    $region7: #{tpu_custom_call.1} parent=1 // loop_footer_branch
      %16 = sbr.rel target = $region3
    $region8: #{tpu_custom_call.1} parent=1 // loop_exit
      _
    %979 = vsyncpa [#allocation3], 1
    %s980 = scalar_lea.sflag [#allocation3], 1
    %981 = vsyncpa %s980, 1
    %982 = vsyncpa [#allocation5], 1

</llo_original>
